<compile_context>
chip_gen: v7x
topology: tpu7x:2x2x1
jax: 0.10.0
libtpu: 0.0.40
codegen_flags: <defaults>
</compile_context>

<pallas_src>
import functools

import jax
import jax.numpy as jnp
from jax.experimental import pallas as pl
from jax.experimental.pallas import tpu as pltpu


def positional_encoding_table(max_pos, hidden_size, dtype=jnp.float32):
    """Same table as the PyTorch module's __init__ (exponent d/H for every d)."""
    pos = jnp.arange(max_pos, dtype=jnp.float32)[:, None]        # (P, 1)
    dims = jnp.arange(hidden_size, dtype=jnp.float32)[None, :]   # (1, H)
    angles = pos / (10000.0 ** (dims / float(hidden_size)))      # (P, H)
    even = (jnp.arange(hidden_size)[None, :] % 2) == 0
    pe = jnp.where(even, jnp.sin(angles), jnp.cos(angles))
    return pe.astype(dtype)


def _pe_add_kernel(x_ref, pe_ref, o_ref):
    # x_ref / o_ref: (1, TG, TC) block of one batch's folded (G, C) slab.
    # pe_ref:        (TG, TC)    matching PE block; its block index is
    #                            independent of the batch grid axis, so it
    #                            stays resident in VMEM across the batch sweep.
    o_ref[...] = x_ref[...] + pe_ref[...][None, :, :]


def _choose_group(S, H):
    """Pick G | S so the folded view (B, G, (S//G)*H) is sublane-dense."""
    if H % 128 == 0:
        return S                      # natural (B, S, H) view: no reshape at all
    divisors = [g for g in range(1, S + 1) if S % g == 0]
    aligned = [g for g in divisors if g >= 8 and ((S // g) * H) % 128 == 0]
    if aligned:
        return aligned[0]             # sublane-dense AND lane width % 128 == 0
    dense = [g for g in divisors if g >= 8]
    if dense:
        return dense[0]               # sublane-dense, lanes partially masked
    return S                          # S < 8: tiny, accept < 8 sublanes


def _pick_tiles(G, C, itemsize, target_bytes):
    """Largest (TG, TC) block <= target_bytes honoring the (8, 128) rule."""
    tg_opts = sorted(set(t for t in range(8, G + 1, 8) if G % t == 0) | {G})
    best = None
    for tg in tg_opts:
        tc_opts = set(t for t in range(128, C + 1, 128) if C % t == 0) | {C}
        if C > 128:
            # Largest 128-multiple lane tile fitting the byte target (a partial
            # final lane block is fine for a pure elementwise kernel).
            tc_opts.add(min(C, max(128, (target_bytes // (tg * itemsize)) // 128 * 128)))
        for tc in sorted(tc_opts):
            blk = tg * tc * itemsize
            key = (blk <= target_bytes, blk if blk <= target_bytes else -blk)
            if best is None or key > best[0]:
                best = (key, tg, tc)
    return best[1], best[2]


def positional_encoding_forward(x, pe_table, *, target_block_bytes=2 << 20,
                                min_pallas_bytes=1 << 18):
    """x: (B, S, H); pe_table: (max_pos, H). Returns x + pe_table[:S][None]."""
    B, S, H = x.shape
    if S > pe_table.shape[0]:
        raise ValueError(f"sequence length {S} exceeds max_pos {pe_table.shape[0]}")
    pe = pe_table[:S].astype(x.dtype)                    # (S, H) static slice

    itemsize = x.dtype.itemsize
    if x.size * itemsize < min_pallas_bytes:
        # Tiny inputs: launch + per-step overhead dwarf the work; let XLA fuse.
        return x + pe[None, :, :]

    # Fold part of S onto the sublane axis: (B, S, H) -> (B, G, C).
    G = _choose_group(S, H)
    C = (S // G) * H
    x3 = x.reshape(B, G, C)          # identity when G == S (H % 128 == 0 path)
    pe2 = pe.reshape(G, C)
    # TODO(synk): if profiling shows a relayout copy around this reshape at
    # large shapes with small H, fuse the add into the producer op instead.

    tg, tc = _pick_tiles(G, C, itemsize, target_block_bytes)
    n_g = pl.cdiv(G, tg)
    n_c = pl.cdiv(C, tc)

    # Right-sized VMEM: double-buffered x, out and pe blocks + headroom.
    blk = tg * tc * itemsize
    vmem_limit = int(6 * blk + (4 << 20))

    # Batch is the innermost (fastest) grid axis so pe's block index is
    # unchanged across consecutive steps -> exactly one HBM pass over pe.
    grid = (n_c, n_g, B)

    out = pl.pallas_call(
        _pe_add_kernel,
        out_shape=jax.ShapeDtypeStruct((B, G, C), x.dtype),
        grid_spec=pltpu.PrefetchScalarGridSpec(
            num_scalar_prefetch=0,
            grid=grid,
            in_specs=[
                pl.BlockSpec((1, tg, tc), lambda cj, gi, b: (b, gi, cj)),  # x
                pl.BlockSpec((tg, tc), lambda cj, gi, b: (gi, cj)),        # pe
            ],
            out_specs=pl.BlockSpec((1, tg, tc), lambda cj, gi, b: (b, gi, cj)),
        ),
        compiler_params=pltpu.CompilerParams(
            dimension_semantics=("parallel", "parallel", "parallel"),
            vmem_limit_bytes=vmem_limit,
        ),
        input_output_aliases={0: 0},     # write the result into x's HBM buffer
    )(x3, pe2)
    return out.reshape(B, S, H)


if __name__ == "__main__":
    B, S, H = 2, 8, 32                  # small shapes consistent with the module
    MAX_POS = 16

    key = jax.random.PRNGKey(0)
    x = jax.random.normal(key, (B, S, H), jnp.float32)
    pe_table = positional_encoding_table(MAX_POS, H)

    # Pure-JAX reference (same math as the PyTorch forward).
    ref = x + pe_table[:S][None, :, :]

    # Force the Pallas path even at this tiny demo shape.
    fwd = jax.jit(functools.partial(positional_encoding_forward, min_pallas_bytes=0))
    out = jax.block_until_ready(fwd(x, pe_table))

    assert out.shape == (B, S, H)
    assert bool(jnp.all(jnp.isfinite(out)))
    assert bool(jnp.allclose(out, ref, rtol=1e-6, atol=1e-6))

    # Also exercise the tiny-input XLA bypass (default threshold).
    out_small = jax.block_until_ready(positional_encoding_forward(x, pe_table))
    assert bool(jnp.allclose(out_small, ref, rtol=1e-6, atol=1e-6))

    print("KERNEL_OK")
</pallas_src>

<mosaic_0001>
module attributes {stable_mosaic.version = 11 : i64} {
  func.func @_pe_add_kernel(%arg0: i32, %arg1: i32, %arg2: i32, %arg3: memref<1x8x32xf32, #tpu.memory_space<vmem>>, %arg4: memref<8x32xf32, #tpu.memory_space<vmem>>, %arg5: memref<1x8x32xf32, #tpu.memory_space<vmem>>) attributes {dimension_semantics = [#tpu.dimension_semantics<parallel>, #tpu.dimension_semantics<parallel>, #tpu.dimension_semantics<parallel>], iteration_bounds = array<i64: 1, 1, 2>, scalar_prefetch = 0 : i64, scratch_operands = 0 : i64, tpu.core_type = #tpu.core_type<tc>, window_params = [{transform_indices = @transform_0, window_bounds = array<i64: 1, 8, 32>}, {transform_indices = @transform_1, window_bounds = array<i64: 8, 32>}, {transform_indices = @transform_2, window_bounds = array<i64: 1, 8, 32>}]} {
    %c0 = arith.constant 0 : index
    %c0_0 = arith.constant 0 : index
    %c0_1 = arith.constant 0 : index
    %0 = vector.load %arg3[%c0, %c0_0, %c0_1] : memref<1x8x32xf32, #tpu.memory_space<vmem>>, vector<1x8x32xf32>
    %c0_2 = arith.constant 0 : index
    %c0_3 = arith.constant 0 : index
    %1 = vector.load %arg4[%c0_2, %c0_3] : memref<8x32xf32, #tpu.memory_space<vmem>>, vector<8x32xf32>
    %2 = vector.shape_cast %1 : vector<8x32xf32> to vector<1x8x32xf32>
    %3 = arith.addf %0, %2 : vector<1x8x32xf32>
    %c0_4 = arith.constant 0 : index
    %c0_5 = arith.constant 0 : index
    %c0_6 = arith.constant 0 : index
    %4 = vector.load %arg5[%c0_4, %c0_5, %c0_6] : memref<1x8x32xf32, #tpu.memory_space<vmem>>, vector<1x8x32xf32>
    tpu.vector_store %arg5[%c0_4, %c0_5, %c0_6], %3 {strides = array<i32>} : memref<1x8x32xf32, #tpu.memory_space<vmem>>, vector<1x8x32xf32>,
    return
  }
  func.func @transform_0(%arg0: i32, %arg1: i32, %arg2: i32) -> (i32, i32, i32) {
    %c0_i32 = arith.constant 0 : i32
    return %arg2, %arg1, %arg0 : i32, i32, i32
  }
  func.func @transform_1(%arg0: i32, %arg1: i32, %arg2: i32) -> (i32, i32) {
    %c0_i32 = arith.constant 0 : i32
    return %arg1, %arg0 : i32, i32
  }
  func.func @transform_2(%arg0: i32, %arg1: i32, %arg2: i32) -> (i32, i32, i32) {
    %c0_i32 = arith.constant 0 : i32
    return %arg2, %arg1, %arg0 : i32, i32, i32
  }
}

</mosaic_0001>

<llo_original>
// kernel: positional_encoding_forward.1
$region0: #{positional_encoding_forward.1}
  #allocation0 [shape = 'u32[]', space=smem, size = 0x4, offset = 0x4, fixed_abs, tag = 'smem constant byte address 0x4 - core index']
  #allocation1 [shape = 'u32[144,128]{1,0:T(1,128)}', space=vmem, size = 0x12000, scoped, tag = 'internal scratch']
  %s0 = inlined_call_operand.hbm [shape: f32[2,8,32], index: 0, kind: input, shape index: {}, may-alias: {0,2}]
  %s1 = inlined_call_operand.vmem [shape: f32[8,32], index: 1, kind: input, shape index: {}]
  %s2 = inlined_call_operand.hbm [shape: f32[2,8,32], index: 2, kind: output, shape index: {}, may-alias: {0,2}]
  %s3 = sld [smem:[#allocation0]]
  $region45: #{positional_encoding_forward.1} parent=0
    _
  %s5 = ssub.s32 1, %s3
  %s6 = scalar_select 0, %s5, %s3
  $region1: #{positional_encoding_forward.1} parent=0
    #allocation2 [shape = 'u8[8192]{0}', space=vmem, size = 0x2000, scoped, tag = 'input window, operand 0']
    #allocation3 [shape = 's32[2]{0}', space=sflag, size = 0x8, scoped, tag = 'scoped memory for positional_encoding_forward.1']
    #allocation4 [shape = 's32[2]{0}', space=sflag, size = 0x8, scoped, tag = 'scoped memory for positional_encoding_forward.1']
    #allocation5 [shape = 'u8[8192]{0}', space=vmem, size = 0x2000, scoped, tag = 'output window, operand 0']
    %7 = vsyncpa [#allocation3], 0
    %s8 = scalar_lea.sflag [#allocation3], 1
    %9 = vsyncpa %s8, 0
    %10 = vsyncpa [#allocation4], 0
    %s11 = scalar_lea.sflag [#allocation4], 1
    %12 = vsyncpa %s11, 0
    loop: start=0, step=1, limit=4
    $region2: #{positional_encoding_forward.1} parent=1 // loop_pre_header
      _
    $region3: #{positional_encoding_forward.1} parent=1 // loop_header
      %s14 = sphi 0, %s18
      %p15 = scmp.ge.s32.totalorder %s14, 4
      %s21 = sphi 0, %s40
      %s22 = sphi 0, %s36
      %s23 = sphi 0, %s32
      %s24 = sphi 0, %s21
      %s25 = sphi 0, %s22
      %s26 = sphi 0, %s23
      %s27 = sphi 0, %s24
      %s28 = sphi 0, %s25
      %s29 = sphi 0, %s26
      %s47 = sphi 0, %s49
      %s50 = sphi 0, %s47
      %s51 = sphi 0, %s50
      %s67 = sphi 0, %s51
      %s75 = sphi 0, %s77
      %s78 = sphi 0, %s75
      %s79 = sphi 0, %s78
      %s95 = sphi 0, %s79
      %s105 = sphi 0, %s107
      %s108 = sphi 0, %s105
      %s109 = sphi 0, %s108
      %s125 = sphi 0, %s109
    $region4: #{positional_encoding_forward.1} parent=1 // loop_header_branch
      %17 = sbr.rel (%p15) target = $region8
    $region5: #{positional_encoding_forward.1} parent=1 // loop_body
      %s19 = ssub.s32 %s14, 1
      %s20 = ssub.s32 %s14, 2
      %s30 = sadd.s32 1, %s23
      %p31 = scmp.ge.s32.totalorder %s30, 2
      %s32 = scalar_select %p31, 0, %s30
      %s33 = sadd.s32 1, %s22
      %s34 = scalar_select %p31, %s33, %s22
      %p35 = scmp.ge.s32.totalorder %s34, 1
      %s36 = scalar_select %p35, 0, %s34
      %s37 = sadd.s32 1, %s21
      %s38 = scalar_select %p35, %s37, %s21
      %p39 = scmp.ge.s32.totalorder %s38, 1
      %s40 = scalar_select %p39, 0, %s38
      %s41 = ssub.s32 %s23, %s32
      %s42 = ssub.s32 %s22, %s36
      %s43 = sor.u32 %s41, %s42
      %s44 = ssub.s32 %s21, %s40
      %s45 = sor.u32 %s43, %s44
      %p46 = scmp.eq.s32.totalorder %s45, 0
      %s48 = sadd.s32 %s47, 1
      %s49 = scalar_select %p46, %s47, %s48
      %p52 = pneg %p46
      %p53 = scmp.eq.s32.totalorder %s14, 1
      %p54 = por %p52, %p53
      %p55 = scmp.ne.s32.totalorder %s47, %s50
      %p56 = scmp.eq.s32.totalorder %s14, 0
      %p57 = por %p55, %p56
      %p58 = scmp.ne.s32.totalorder %s47, %s50
      %p59 = scmp.eq.s32.totalorder %s19, 1
      %p60 = por %p58, %p59
      %p61 = scmp.ne.s32.totalorder %s50, %s51
      %p62 = scmp.eq.s32.totalorder %s19, 0
      %p63 = por %p61, %p62
      %p64 = scmp.ne.s32.totalorder %s50, %s51
      %p65 = scmp.eq.s32.totalorder %s20, 1
      %p66 = por %p64, %p65
      %p68 = scmp.ne.s32.totalorder %s51, %s67
      %p69 = scmp.eq.s32.totalorder %s20, 0
      %p70 = por %p68, %p69
      %s71 = ssub.s32 %s22, %s36
      %s72 = ssub.s32 %s21, %s40
      %s73 = sor.u32 %s71, %s72
      %p74 = scmp.eq.s32.totalorder %s73, 0
      %s76 = sadd.s32 %s75, 1
      %s77 = scalar_select %p74, %s75, %s76
      %p80 = pneg %p74
      %p81 = scmp.eq.s32.totalorder %s14, 1
      %p82 = por %p80, %p81
      %p83 = scmp.ne.s32.totalorder %s75, %s78
      %p84 = scmp.eq.s32.totalorder %s14, 0
      %p85 = por %p83, %p84
      %p86 = scmp.ne.s32.totalorder %s75, %s78
      %p87 = scmp.eq.s32.totalorder %s19, 1
      %p88 = por %p86, %p87
      %p89 = scmp.ne.s32.totalorder %s78, %s79
      %p90 = scmp.eq.s32.totalorder %s19, 0
      %p91 = por %p89, %p90
      %p92 = scmp.ne.s32.totalorder %s78, %s79
      %p93 = scmp.eq.s32.totalorder %s20, 1
      %p94 = por %p92, %p93
      %p96 = scmp.ne.s32.totalorder %s79, %s95
      %p97 = scmp.eq.s32.totalorder %s20, 0
      %p98 = por %p96, %p97
      %s99 = ssub.s32 %s23, %s32
      %s100 = ssub.s32 %s22, %s36
      %s101 = sor.u32 %s99, %s100
      %s102 = ssub.s32 %s21, %s40
      %s103 = sor.u32 %s101, %s102
      %p104 = scmp.eq.s32.totalorder %s103, 0
      %s106 = sadd.s32 %s105, 1
      %s107 = scalar_select %p104, %s105, %s106
      %p110 = pneg %p104
      %p111 = scmp.eq.s32.totalorder %s14, 1
      %p112 = por %p110, %p111
      %p113 = scmp.ne.s32.totalorder %s105, %s108
      %p114 = scmp.eq.s32.totalorder %s14, 0
      %p115 = por %p113, %p114
      %p116 = scmp.ne.s32.totalorder %s105, %s108
      %p117 = scmp.eq.s32.totalorder %s19, 1
      %p118 = por %p116, %p117
      %p119 = scmp.ne.s32.totalorder %s108, %s109
      %p120 = scmp.eq.s32.totalorder %s19, 0
      %p121 = por %p119, %p120
      %p122 = scmp.ne.s32.totalorder %s108, %s109
      %p123 = scmp.eq.s32.totalorder %s20, 1
      %p124 = por %p122, %p123
      %p126 = scmp.ne.s32.totalorder %s109, %s125
      %p127 = scmp.eq.s32.totalorder %s20, 0
      %p128 = por %p126, %p127
      %p129 = scmp.le.s32.totalorder 1, %s14
      %p130 = scmp.lt.s32.totalorder %s14, 3
      %p131 = pnand %p129, %p130
      %p132 = pneg %p131
      // Predicated region
      $region9: #{positional_encoding_forward.1} parent=5 // pred_check
        _
      $region10: #{positional_encoding_forward.1} parent=5 // pred_check_branch
        %134 = sbr.rel (%p131) target = $region12
      $region11: #{positional_encoding_forward.1} parent=5 // pred_region
        %s135 = ssub.s32 %s14, 1
        // Predicated region
        $region13: #{positional_encoding_forward.1} parent=11 // pred_check
          %p136 = pneg %p91
        $region14: #{positional_encoding_forward.1} parent=11 // pred_check_branch
          %138 = sbr.rel (%p136) target = $region16
        $region15: #{positional_encoding_forward.1} parent=11 // pred_region
          %p139 = scmp.lt.s32.totalorder %s25, 0
          %s140 = scalar_select %p139, %s25, 0
          %p141 = scmp.lt.s32.totalorder %s24, 0
          %s142 = scalar_select %p141, %s24, 0
          %s143 = sadd.s32 %s142, %s140
          %s144 = smul.addr %s143, 8
          %s145 = scalar_lea.vmem %s1, %s144
        $region16: #{positional_encoding_forward.1} parent=11 // pred_fallthru
          _
      $region12: #{positional_encoding_forward.1} parent=5 // pred_fallthru
        _
      %p146 = scmp.lt.s32.totalorder %s14, 2
      // Predicated region
      $region17: #{positional_encoding_forward.1} parent=5 // pred_check
        %p147 = pneg %p146
      $region18: #{positional_encoding_forward.1} parent=5 // pred_check_branch
        %149 = sbr.rel (%p147) target = $region20
      $region19: #{positional_encoding_forward.1} parent=5 // pred_region
        // Predicated region
        $region21: #{positional_encoding_forward.1} parent=19 // pred_check
          %p150 = pneg %p57
        $region22: #{positional_encoding_forward.1} parent=19 // pred_check_branch
          %152 = sbr.rel (%p150) target = $region24
        $region23: #{positional_encoding_forward.1} parent=19 // pred_region
          %s153 = sand.u32 %s47, 1
          %s154 = scalar_lea.sflag [#allocation3], %s153
          %s155 = sand.u32 %s47, 1
          %s156 = smul.addr %s155, 8
          %s157 = scalar_lea.vmem [#allocation2], %s156
          %s159 = ssub.s32 128, 128
          %160 = vsyncadd %s154, %s159
          %s161 = sadd.s32 %s21, %s22
          %s162 = sadd.s32 %s161, %s23
          %s163 = smul.addr %s162, 128
          %s164 = scalar_lea.hbm %s0, %s163
          %s166 = sshll.u32 %s157, 4
          %s167 = int_to_ptr.vmem [resolvable:$true] %s166
          %169 = dma.hbm_to_vmem [thread:$0]  %s164, 128, %s167, %s154
        $region24: #{positional_encoding_forward.1} parent=19 // pred_fallthru
          _
      $region20: #{positional_encoding_forward.1} parent=5 // pred_fallthru
        _
      %p170 = scmp.le.s32.totalorder 1, %s14
      %p171 = scmp.lt.s32.totalorder %s14, 3
      %p172 = pnand %p170, %p171
      %p173 = pneg %p172
      // Predicated region
      $region25: #{positional_encoding_forward.1} parent=5 // pred_check
        _
      $region26: #{positional_encoding_forward.1} parent=5 // pred_check_branch
        %175 = sbr.rel (%p172) target = $region28
      $region27: #{positional_encoding_forward.1} parent=5 // pred_region
        %s176 = ssub.s32 %s14, 1
        %s177 = sand.u32 %s50, 1
        %s178 = scalar_lea.sflag [#allocation3], %s177
        %s179 = sand.u32 %s50, 1
        %s180 = smul.addr %s179, 8
        %s181 = scalar_lea.vmem [#allocation2], %s180
        // Predicated region
        $region29: #{positional_encoding_forward.1} parent=27 // pred_check
          %p182 = pneg %p63
        $region30: #{positional_encoding_forward.1} parent=27 // pred_check_branch
          %184 = sbr.rel (%p182) target = $region32
        $region31: #{positional_encoding_forward.1} parent=27 // pred_region
          %185 = dma.done %s178, 128
        $region32: #{positional_encoding_forward.1} parent=27 // pred_fallthru
          _
        %s186 = sand.u32 %s50, 1
        %s187 = scalar_lea.sflag [#allocation3], %s186
        %s188 = sand.u32 %s50, 1
        %s189 = smul.addr %s188, 8
        %s190 = scalar_lea.vmem [#allocation2], %s189
        %p191 = pneg %p63
        %p192 = pneg %p60
        %p193 = scmp.lt.s32.totalorder %s25, 0
        %s194 = scalar_select %p193, %s25, 0
        %p195 = scmp.lt.s32.totalorder %s24, 0
        %s196 = scalar_select %p195, %s24, 0
        %s197 = sadd.s32 %s196, %s194
        %s198 = smul.addr %s197, 8
        %s199 = scalar_lea.vmem %s1, %s198
        %p200 = pneg %p91
        %p201 = pneg %p88
        %p202 = pneg %p121
        %p203 = pneg %p118
        %s204 = sand.u32 %s108, 1
        %s205 = scalar_lea.sflag [#allocation4], %s204
        %s206 = sand.u32 %s108, 1
        %s207 = smul.addr %s206, 8
        %s208 = scalar_lea.vmem [#allocation5], %s207
        %p209 = scmp.lt.s32.totalorder %s25, 0
        %s210 = scalar_select %p209, %s25, 0
        %p211 = scmp.lt.s32.totalorder %s24, 0
        %s212 = scalar_select %p211, %s24, 0
        %s213 = sadd.s32 %s212, %s210
        %s214 = smul.addr %s213, 8
        %s215 = scalar_lea.vmem %s1, %s214
        %v216 = vld [vmem:[%s181] sm:$0xff]
        %v217 = vld [vmem:[%s215] sm:$0xff]
        %v218 = vadd.f32 %v216, %v217
        %vm219 = vcmask 261120
        %220 = vst.msk [vmem:[%s208] sm:$0xff] %vm219, %v218
        %s221 = sand.u32 %s108, 1
        %s222 = scalar_lea.sflag [#allocation4], %s221
        %s223 = sand.u32 %s108, 1
        %s224 = smul.addr %s223, 8
        %s225 = scalar_lea.vmem [#allocation5], %s224
        // Predicated region
        $region33: #{positional_encoding_forward.1} parent=27 // pred_check
          %p226 = pneg %p118
        $region34: #{positional_encoding_forward.1} parent=27 // pred_check_branch
          %228 = sbr.rel (%p226) target = $region36
        $region35: #{positional_encoding_forward.1} parent=27 // pred_region
          %s230 = ssub.s32 128, 128
          %231 = vsyncadd %s222, %s230
          %s232 = sadd.s32 %s24, %s25
          %s233 = sadd.s32 %s232, %s26
          %s234 = smul.addr %s233, 128
          %s235 = scalar_lea.hbm %s2, %s234
          %s237 = sshll.u32 %s225, 4
          %s238 = int_to_ptr.vmem [resolvable:$true] %s237
          %240 = dma.vmem_to_hbm [thread:$0]  %s238, 128, %s235, %s222
        $region36: #{positional_encoding_forward.1} parent=27 // pred_fallthru
          _
      $region28: #{positional_encoding_forward.1} parent=5 // pred_fallthru
        _
      %p241 = scmp.le.s32.totalorder 2, %s14
      // Predicated region
      $region37: #{positional_encoding_forward.1} parent=5 // pred_check
        %p242 = pneg %p241
      $region38: #{positional_encoding_forward.1} parent=5 // pred_check_branch
        %244 = sbr.rel (%p242) target = $region40
      $region39: #{positional_encoding_forward.1} parent=5 // pred_region
        %s245 = ssub.s32 %s14, 2
        // Predicated region
        $region41: #{positional_encoding_forward.1} parent=39 // pred_check
          %p246 = pneg %p124
        $region42: #{positional_encoding_forward.1} parent=39 // pred_check_branch
          %248 = sbr.rel (%p246) target = $region44
        $region43: #{positional_encoding_forward.1} parent=39 // pred_region
          %s249 = sand.u32 %s109, 1
          %s250 = scalar_lea.sflag [#allocation4], %s249
          %s251 = sand.u32 %s109, 1
          %s252 = smul.addr %s251, 8
          %s253 = scalar_lea.vmem [#allocation5], %s252
          %254 = dma.done %s250, 128
        $region44: #{positional_encoding_forward.1} parent=39 // pred_fallthru
          _
      $region40: #{positional_encoding_forward.1} parent=5 // pred_fallthru
        _
    $region6: #{positional_encoding_forward.1} parent=1 // loop_footer
      %s18 = sadd.s32 1, %s14
    $region7: #{positional_encoding_forward.1} parent=1 // loop_footer_branch
      %13 = sbr.rel target = $region3
    $region8: #{positional_encoding_forward.1} parent=1 // loop_exit
      _
    %255 = vsyncpa [#allocation3], 1
    %s256 = scalar_lea.sflag [#allocation3], 1
    %257 = vsyncpa %s256, 1
    %258 = vsyncpa [#allocation4], 1
    %s259 = scalar_lea.sflag [#allocation4], 1
    %260 = vsyncpa %s259, 1

</llo_original>
